<compile_context>
chip_gen: v6e
topology: v6e:2x2x1
jax: 0.10.0
libtpu: 0.0.40
codegen_flags: <defaults>
</compile_context>

<pallas_src>
import jax
import jax.numpy as jnp
from jax.experimental import pallas as pl
from jax.experimental.pallas import tpu as pltpu

E = 16            # embedding_dim
H = 64            # lstm hidden_size
L = 5             # lstm num_layers
F1 = 128          # fc1 out_features
B = 2             # batch
T = 1             # seq len (forced to 1 by reshape(B,-1) -> Linear(64, ...))
V = 32            # num_embeddings

GW = 256          # packed gate width: [i | g | o] in lanes 0:192, lanes 192:256 zero pad
KEEP = (0, 2, 3)  # PyTorch gate order along 4H is [i, f, g, o]; f-gate dead (c_prev == 0)


def _gate_output(gates):
    """gates: (B, GW) f32 pre-activations -> h: (B, H) f32.  c_prev == 0 => c = i * g."""
    i_g = jax.nn.sigmoid(gates[:, 0:H])
    g_g = jnp.tanh(gates[:, H:2 * H])
    o_g = jax.nn.sigmoid(gates[:, 2 * H:3 * H])
    return o_g * jnp.tanh(i_g * g_g)


def lstm_model_kernel(ids_ref, tab_ref, wr_ref, b_ref,
                      w1_ref, b1_ref, w2_ref, b2_ref, out_ref):
    """Whole forward pass on one TensorCore.

    ids_ref : (B, T) int32, SMEM       token ids (pre-clamped)
    tab_ref : (V, 1, GW) f32, VMEM     fused embedding @ layer-0 gate weights (+ layer-0 bias)
    wr_ref  : (L-1, H, GW) bf16        layers 1..4 input->[i|g|o] weights (transposed, packed)
    b_ref   : (L-1, 1, GW) f32         layers 1..4 combined bias (b_ih + b_hh), packed
    w1_ref  : (H, F1) bf16, b1_ref: (1, F1) f32
    w2_ref  : (F1, V) bf16, b2_ref: (1, V) f32
    out_ref : (B, V) f32
    """
    # Layer 0 fused with the embedding lookup: gather the precomputed gate pre-activations
    # by token id (dynamic leading-axis index) -> no layer-0 matmul.
    rows = [tab_ref[ids_ref[b, 0]] for b in range(B)]            # each (1, GW) f32
    gates = jnp.concatenate(rows, axis=0)                         # (B, GW) f32
    h = _gate_output(gates)                                       # (B, H)  f32

    for layer in range(L - 1):                                    # layers 1..4, static unroll
        # Single MXU matmul per layer (h_prev = 0 kills the recurrent term),
        # bf16 operands, f32 accumulation, f32 bias add.
        gates = jnp.dot(h.astype(jnp.bfloat16), wr_ref[layer],
                        preferred_element_type=jnp.float32) + b_ref[layer]
        h = _gate_output(gates)

    # MLP head: fc1 -> ReLU -> fc2.
    z = jnp.dot(h.astype(jnp.bfloat16), w1_ref[...],
                preferred_element_type=jnp.float32) + b1_ref[...]
    z = jnp.maximum(z, 0.0)
    out = jnp.dot(z.astype(jnp.bfloat16), w2_ref[...],
                  preferred_element_type=jnp.float32) + b2_ref[...]
    out_ref[...] = out.astype(out_ref.dtype)


def init_params(key):
    """PyTorch-style init, packed into the kernel layout described above."""
    ks = list(jax.random.split(key, 1 + 3 * L + 4))
    it = iter(ks)

    # Embedding ~ N(0, 1).
    emb = jax.random.normal(next(it), (V, E), jnp.float32)

    k_h = float(H) ** -0.5
    table = None
    wr_list, b_list = [], []
    for layer in range(L):
        in_dim = E if layer == 0 else H
        w_ih = jax.random.uniform(next(it), (4 * H, in_dim), jnp.float32, -k_h, k_h)
        b_ih = jax.random.uniform(next(it), (4 * H,), jnp.float32, -k_h, k_h)
        b_hh = jax.random.uniform(next(it), (4 * H,), jnp.float32, -k_h, k_h)
        # NOTE: W_hh is never materialized - with T == 1 and zero initial state the
        # recurrent matmul contributes nothing to the forward output.
        bias = b_ih + b_hh

        w_pack = jnp.zeros((in_dim, GW), jnp.float32)
        b_pack = jnp.zeros((1, GW), jnp.float32)
        for k, g in enumerate(KEEP):                       # i, g, o (skip dead f-gate)
            w_pack = w_pack.at[:, k * H:(k + 1) * H].set(w_ih[g * H:(g + 1) * H, :].T)
            b_pack = b_pack.at[:, k * H:(k + 1) * H].set(bias[g * H:(g + 1) * H][None, :])

        if layer == 0:
            # Fuse embedding lookup + layer-0 projection + layer-0 bias into one table.
            table = (emb @ w_pack + b_pack).reshape(V, 1, GW)       # (V, 1, GW) f32
        else:
            wr_list.append(w_pack.astype(jnp.bfloat16))             # (H, GW) bf16
            b_list.append(b_pack)                                   # (1, GW) f32

    wr = jnp.stack(wr_list)                                         # (L-1, H, GW) bf16
    b = jnp.stack(b_list)                                           # (L-1, 1, GW) f32

    k1 = float(H) ** -0.5
    w1_raw = jax.random.uniform(next(it), (F1, H), jnp.float32, -k1, k1)
    b1 = jax.random.uniform(next(it), (F1,), jnp.float32, -k1, k1)
    k2 = float(F1) ** -0.5
    w2_raw = jax.random.uniform(next(it), (V, F1), jnp.float32, -k2, k2)
    b2 = jax.random.uniform(next(it), (V,), jnp.float32, -k2, k2)

    w1 = w1_raw.T.astype(jnp.bfloat16)                              # (H, F1) bf16 (no padding)
    w2 = w2_raw.T.astype(jnp.bfloat16)                              # (F1, V) bf16

    return dict(table=table, wr=wr, b=b,
                w1=w1, b1=b1.reshape(1, F1),
                w2=w2, b2=b2.reshape(1, V))


_COST = pl.CostEstimate(
    flops=2 * B * ((L - 1) * H * GW + H * F1 + F1 * V),
    transcendentals=B * L * 4 * H,
    bytes_accessed=(V * GW * 4            # fused embedding/layer-0 table
                    + (L - 1) * H * GW * 2
                    + (L - 1) * GW * 4
                    + H * F1 * 2 + F1 * 4
                    + F1 * V * 2 + V * 4
                    + B * T * 4 + B * V * 4),
)


@jax.jit
def lstm_model_forward(x_ids, params):
    assert x_ids.shape == (B, T), "reshape(B,-1) -> Linear(64, ...) requires T == 1"
    # Clamp ids: in-kernel VMEM gathers have no bounds check (OOB reads are silent).
    ids = jnp.clip(x_ids, 0, V - 1).astype(jnp.int32)
    smem = pl.BlockSpec(memory_space=pltpu.MemorySpace.SMEM)
    vmem = pl.BlockSpec(memory_space=pltpu.MemorySpace.VMEM)
    return pl.pallas_call(
        lstm_model_kernel,
        out_shape=jax.ShapeDtypeStruct((B, V), jnp.float32),
        in_specs=[smem] + [vmem] * 7,
        out_specs=vmem,
        cost_estimate=_COST,
    )(ids, params["table"], params["wr"], params["b"],
      params["w1"], params["b1"], params["w2"], params["b2"])


def forward_reference(x_ids, params):
    """Pure-JAX mirror of the kernel math (same packed weights) for validation."""
    ids = jnp.clip(x_ids[:, 0], 0, V - 1)
    gates = params["table"].reshape(V, GW)[ids]                      # (B, GW) f32
    h = _gate_output(gates)
    for layer in range(L - 1):
        gates = jnp.dot(h.astype(jnp.bfloat16), params["wr"][layer],
                        preferred_element_type=jnp.float32) + params["b"][layer]
        h = _gate_output(gates)
    z = jnp.maximum(jnp.dot(h.astype(jnp.bfloat16), params["w1"],
                            preferred_element_type=jnp.float32) + params["b1"], 0.0)
    return jnp.dot(z.astype(jnp.bfloat16), params["w2"],
                   preferred_element_type=jnp.float32) + params["b2"]


if __name__ == "__main__":
    key = jax.random.PRNGKey(0)
    k_param, k_ids = jax.random.split(key)
    params = init_params(k_param)
    x_ids = jax.random.randint(k_ids, (B, T), 0, V, dtype=jnp.int32)   # token ids

    out = lstm_model_forward(x_ids, params)
    jax.block_until_ready(out)

    assert out.shape == (B, V) and out.dtype == jnp.float32
    assert bool(jnp.all(jnp.isfinite(out)))
    ref = forward_reference(x_ids, params)
    assert bool(jnp.allclose(out, ref, rtol=2e-2, atol=2e-2))
    print("KERNEL_OK")
</pallas_src>

<mosaic_0001>
module attributes {stable_mosaic.version = 11 : i64} {
  func.func @lstm_model_kernel(%arg0: memref<2x1xi32, #tpu.memory_space<smem>>, %arg1: memref<32x1x256xf32, #tpu.memory_space<vmem>>, %arg2: memref<4x64x256xbf16, #tpu.memory_space<vmem>>, %arg3: memref<4x1x256xf32, #tpu.memory_space<vmem>>, %arg4: memref<64x128xbf16, #tpu.memory_space<vmem>>, %arg5: memref<1x128xf32, #tpu.memory_space<vmem>>, %arg6: memref<128x32xbf16, #tpu.memory_space<vmem>>, %arg7: memref<1x32xf32, #tpu.memory_space<vmem>>, %arg8: memref<2x32xf32, #tpu.memory_space<vmem>>) attributes {dimension_semantics = [], scalar_prefetch = 0 : i64, scratch_operands = 0 : i64, tpu.core_type = #tpu.core_type<tc>} {
    %c0 = arith.constant 0 : index
    %c0_0 = arith.constant 0 : index
    %0 = memref.load %arg0[%c0, %c0_0] : memref<2x1xi32, #tpu.memory_space<smem>>
    %1 = arith.index_cast %0 : i32 to index
    %c0_1 = arith.constant 0 : index
    %c0_2 = arith.constant 0 : index
    %2 = vector.load %arg1[%1, %c0_1, %c0_2] : memref<32x1x256xf32, #tpu.memory_space<vmem>>, vector<1x1x256xf32>
    %3 = vector.shape_cast %2 : vector<1x1x256xf32> to vector<1x256xf32>
    %c1 = arith.constant 1 : index
    %c0_3 = arith.constant 0 : index
    %4 = memref.load %arg0[%c1, %c0_3] : memref<2x1xi32, #tpu.memory_space<smem>>
    %5 = arith.index_cast %4 : i32 to index
    %c0_4 = arith.constant 0 : index
    %c0_5 = arith.constant 0 : index
    %6 = vector.load %arg1[%5, %c0_4, %c0_5] : memref<32x1x256xf32, #tpu.memory_space<vmem>>, vector<1x1x256xf32>
    %7 = vector.shape_cast %6 : vector<1x1x256xf32> to vector<1x256xf32>
    %8 = tpu.concatenate %3, %7 in 0 : vector<1x256xf32>, vector<1x256xf32> -> vector<2x256xf32>
    %9 = vector.extract_strided_slice %8 {offsets = [0, 0], sizes = [2, 64], strides = [1, 1]} : vector<2x256xf32> to vector<2x64xf32>
    %10 = arith.negf %9 : vector<2x64xf32>
    %11 = math.exp %10 : vector<2x64xf32>
    %cst = arith.constant 1.000000e+00 : f32
    %12 = vector.broadcast %cst : f32 to vector<2x64xf32>
    %13 = arith.addf %12, %11 : vector<2x64xf32>
    %14 = arith.divf %12, %13 : vector<2x64xf32>
    %15 = vector.extract_strided_slice %8 {offsets = [0, 64], sizes = [2, 64], strides = [1, 1]} : vector<2x256xf32> to vector<2x64xf32>
    %16 = math.tanh %15 : vector<2x64xf32>
    %17 = vector.extract_strided_slice %8 {offsets = [0, 128], sizes = [2, 64], strides = [1, 1]} : vector<2x256xf32> to vector<2x64xf32>
    %18 = arith.negf %17 : vector<2x64xf32>
    %19 = math.exp %18 : vector<2x64xf32>
    %cst_6 = arith.constant 1.000000e+00 : f32
    %20 = vector.broadcast %cst_6 : f32 to vector<2x64xf32>
    %21 = arith.addf %20, %19 : vector<2x64xf32>
    %22 = arith.divf %20, %21 : vector<2x64xf32>
    %23 = arith.mulf %14, %16 : vector<2x64xf32>
    %24 = math.tanh %23 : vector<2x64xf32>
    %25 = arith.mulf %22, %24 : vector<2x64xf32>
    %26 = arith.truncf %25 : vector<2x64xf32> to vector<2x64xbf16>
    %c0_7 = arith.constant 0 : index
    %c0_8 = arith.constant 0 : index
    %c0_9 = arith.constant 0 : index
    %27 = vector.load %arg2[%c0_7, %c0_8, %c0_9] : memref<4x64x256xbf16, #tpu.memory_space<vmem>>, vector<1x64x256xbf16>
    %28 = vector.shape_cast %27 : vector<1x64x256xbf16> to vector<64x256xbf16>
    %cst_10 = arith.constant dense<0.000000e+00> : vector<2x256xf32>
    %29 = tpu.matmul %26, %28, %cst_10 {dimension_numbers = #tpu.dot_dimension_numbers<[1], [0], [0], [1], [0, 0, 1, 1], [], []>} : vector<2x64xbf16>, vector<64x256xbf16>, vector<2x256xf32> -> vector<2x256xf32>
    %c0_11 = arith.constant 0 : index
    %c0_12 = arith.constant 0 : index
    %c0_13 = arith.constant 0 : index
    %30 = vector.load %arg3[%c0_11, %c0_12, %c0_13] : memref<4x1x256xf32, #tpu.memory_space<vmem>>, vector<1x1x256xf32>
    %31 = vector.shape_cast %30 : vector<1x1x256xf32> to vector<1x256xf32>
    %32 = vector.broadcast %31 : vector<1x256xf32> to vector<2x256xf32>
    %33 = arith.addf %29, %32 : vector<2x256xf32>
    %34 = vector.extract_strided_slice %33 {offsets = [0, 0], sizes = [2, 64], strides = [1, 1]} : vector<2x256xf32> to vector<2x64xf32>
    %35 = arith.negf %34 : vector<2x64xf32>
    %36 = math.exp %35 : vector<2x64xf32>
    %cst_14 = arith.constant 1.000000e+00 : f32
    %37 = vector.broadcast %cst_14 : f32 to vector<2x64xf32>
    %38 = arith.addf %37, %36 : vector<2x64xf32>
    %39 = arith.divf %37, %38 : vector<2x64xf32>
    %40 = vector.extract_strided_slice %33 {offsets = [0, 64], sizes = [2, 64], strides = [1, 1]} : vector<2x256xf32> to vector<2x64xf32>
    %41 = math.tanh %40 : vector<2x64xf32>
    %42 = vector.extract_strided_slice %33 {offsets = [0, 128], sizes = [2, 64], strides = [1, 1]} : vector<2x256xf32> to vector<2x64xf32>
    %43 = arith.negf %42 : vector<2x64xf32>
    %44 = math.exp %43 : vector<2x64xf32>
    %cst_15 = arith.constant 1.000000e+00 : f32
    %45 = vector.broadcast %cst_15 : f32 to vector<2x64xf32>
    %46 = arith.addf %45, %44 : vector<2x64xf32>
    %47 = arith.divf %45, %46 : vector<2x64xf32>
    %48 = arith.mulf %39, %41 : vector<2x64xf32>
    %49 = math.tanh %48 : vector<2x64xf32>
    %50 = arith.mulf %47, %49 : vector<2x64xf32>
    %51 = arith.truncf %50 : vector<2x64xf32> to vector<2x64xbf16>
    %c1_16 = arith.constant 1 : index
    %c0_17 = arith.constant 0 : index
    %c0_18 = arith.constant 0 : index
    %52 = vector.load %arg2[%c1_16, %c0_17, %c0_18] : memref<4x64x256xbf16, #tpu.memory_space<vmem>>, vector<1x64x256xbf16>
    %53 = vector.shape_cast %52 : vector<1x64x256xbf16> to vector<64x256xbf16>
    %cst_19 = arith.constant dense<0.000000e+00> : vector<2x256xf32>
    %54 = tpu.matmul %51, %53, %cst_19 {dimension_numbers = #tpu.dot_dimension_numbers<[1], [0], [0], [1], [0, 0, 1, 1], [], []>} : vector<2x64xbf16>, vector<64x256xbf16>, vector<2x256xf32> -> vector<2x256xf32>
    %c1_20 = arith.constant 1 : index
    %c0_21 = arith.constant 0 : index
    %c0_22 = arith.constant 0 : index
    %55 = vector.load %arg3[%c1_20, %c0_21, %c0_22] : memref<4x1x256xf32, #tpu.memory_space<vmem>>, vector<1x1x256xf32>
    %56 = vector.shape_cast %55 : vector<1x1x256xf32> to vector<1x256xf32>
    %57 = vector.broadcast %56 : vector<1x256xf32> to vector<2x256xf32>
    %58 = arith.addf %54, %57 : vector<2x256xf32>
    %59 = vector.extract_strided_slice %58 {offsets = [0, 0], sizes = [2, 64], strides = [1, 1]} : vector<2x256xf32> to vector<2x64xf32>
    %60 = arith.negf %59 : vector<2x64xf32>
    %61 = math.exp %60 : vector<2x64xf32>
    %cst_23 = arith.constant 1.000000e+00 : f32
    %62 = vector.broadcast %cst_23 : f32 to vector<2x64xf32>
    %63 = arith.addf %62, %61 : vector<2x64xf32>
    %64 = arith.divf %62, %63 : vector<2x64xf32>
    %65 = vector.extract_strided_slice %58 {offsets = [0, 64], sizes = [2, 64], strides = [1, 1]} : vector<2x256xf32> to vector<2x64xf32>
    %66 = math.tanh %65 : vector<2x64xf32>
    %67 = vector.extract_strided_slice %58 {offsets = [0, 128], sizes = [2, 64], strides = [1, 1]} : vector<2x256xf32> to vector<2x64xf32>
    %68 = arith.negf %67 : vector<2x64xf32>
    %69 = math.exp %68 : vector<2x64xf32>
    %cst_24 = arith.constant 1.000000e+00 : f32
    %70 = vector.broadcast %cst_24 : f32 to vector<2x64xf32>
    %71 = arith.addf %70, %69 : vector<2x64xf32>
    %72 = arith.divf %70, %71 : vector<2x64xf32>
    %73 = arith.mulf %64, %66 : vector<2x64xf32>
    %74 = math.tanh %73 : vector<2x64xf32>
    %75 = arith.mulf %72, %74 : vector<2x64xf32>
    %76 = arith.truncf %75 : vector<2x64xf32> to vector<2x64xbf16>
    %c2 = arith.constant 2 : index
    %c0_25 = arith.constant 0 : index
    %c0_26 = arith.constant 0 : index
    %77 = vector.load %arg2[%c2, %c0_25, %c0_26] : memref<4x64x256xbf16, #tpu.memory_space<vmem>>, vector<1x64x256xbf16>
    %78 = vector.shape_cast %77 : vector<1x64x256xbf16> to vector<64x256xbf16>
    %cst_27 = arith.constant dense<0.000000e+00> : vector<2x256xf32>
    %79 = tpu.matmul %76, %78, %cst_27 {dimension_numbers = #tpu.dot_dimension_numbers<[1], [0], [0], [1], [0, 0, 1, 1], [], []>} : vector<2x64xbf16>, vector<64x256xbf16>, vector<2x256xf32> -> vector<2x256xf32>
    %c2_28 = arith.constant 2 : index
    %c0_29 = arith.constant 0 : index
    %c0_30 = arith.constant 0 : index
    %80 = vector.load %arg3[%c2_28, %c0_29, %c0_30] : memref<4x1x256xf32, #tpu.memory_space<vmem>>, vector<1x1x256xf32>
    %81 = vector.shape_cast %80 : vector<1x1x256xf32> to vector<1x256xf32>
    %82 = vector.broadcast %81 : vector<1x256xf32> to vector<2x256xf32>
    %83 = arith.addf %79, %82 : vector<2x256xf32>
    %84 = vector.extract_strided_slice %83 {offsets = [0, 0], sizes = [2, 64], strides = [1, 1]} : vector<2x256xf32> to vector<2x64xf32>
    %85 = arith.negf %84 : vector<2x64xf32>
    %86 = math.exp %85 : vector<2x64xf32>
    %cst_31 = arith.constant 1.000000e+00 : f32
    %87 = vector.broadcast %cst_31 : f32 to vector<2x64xf32>
    %88 = arith.addf %87, %86 : vector<2x64xf32>
    %89 = arith.divf %87, %88 : vector<2x64xf32>
    %90 = vector.extract_strided_slice %83 {offsets = [0, 64], sizes = [2, 64], strides = [1, 1]} : vector<2x256xf32> to vector<2x64xf32>
    %91 = math.tanh %90 : vector<2x64xf32>
    %92 = vector.extract_strided_slice %83 {offsets = [0, 128], sizes = [2, 64], strides = [1, 1]} : vector<2x256xf32> to vector<2x64xf32>
    %93 = arith.negf %92 : vector<2x64xf32>
    %94 = math.exp %93 : vector<2x64xf32>
    %cst_32 = arith.constant 1.000000e+00 : f32
    %95 = vector.broadcast %cst_32 : f32 to vector<2x64xf32>
    %96 = arith.addf %95, %94 : vector<2x64xf32>
    %97 = arith.divf %95, %96 : vector<2x64xf32>
    %98 = arith.mulf %89, %91 : vector<2x64xf32>
    %99 = math.tanh %98 : vector<2x64xf32>
    %100 = arith.mulf %97, %99 : vector<2x64xf32>
    %101 = arith.truncf %100 : vector<2x64xf32> to vector<2x64xbf16>
    %c3 = arith.constant 3 : index
    %c0_33 = arith.constant 0 : index
    %c0_34 = arith.constant 0 : index
    %102 = vector.load %arg2[%c3, %c0_33, %c0_34] : memref<4x64x256xbf16, #tpu.memory_space<vmem>>, vector<1x64x256xbf16>
    %103 = vector.shape_cast %102 : vector<1x64x256xbf16> to vector<64x256xbf16>
    %cst_35 = arith.constant dense<0.000000e+00> : vector<2x256xf32>
    %104 = tpu.matmul %101, %103, %cst_35 {dimension_numbers = #tpu.dot_dimension_numbers<[1], [0], [0], [1], [0, 0, 1, 1], [], []>} : vector<2x64xbf16>, vector<64x256xbf16>, vector<2x256xf32> -> vector<2x256xf32>
    %c3_36 = arith.constant 3 : index
    %c0_37 = arith.constant 0 : index
    %c0_38 = arith.constant 0 : index
    %105 = vector.load %arg3[%c3_36, %c0_37, %c0_38] : memref<4x1x256xf32, #tpu.memory_space<vmem>>, vector<1x1x256xf32>
    %106 = vector.shape_cast %105 : vector<1x1x256xf32> to vector<1x256xf32>
    %107 = vector.broadcast %106 : vector<1x256xf32> to vector<2x256xf32>
    %108 = arith.addf %104, %107 : vector<2x256xf32>
    %109 = vector.extract_strided_slice %108 {offsets = [0, 0], sizes = [2, 64], strides = [1, 1]} : vector<2x256xf32> to vector<2x64xf32>
    %110 = arith.negf %109 : vector<2x64xf32>
    %111 = math.exp %110 : vector<2x64xf32>
    %cst_39 = arith.constant 1.000000e+00 : f32
    %112 = vector.broadcast %cst_39 : f32 to vector<2x64xf32>
    %113 = arith.addf %112, %111 : vector<2x64xf32>
    %114 = arith.divf %112, %113 : vector<2x64xf32>
    %115 = vector.extract_strided_slice %108 {offsets = [0, 64], sizes = [2, 64], strides = [1, 1]} : vector<2x256xf32> to vector<2x64xf32>
    %116 = math.tanh %115 : vector<2x64xf32>
    %117 = vector.extract_strided_slice %108 {offsets = [0, 128], sizes = [2, 64], strides = [1, 1]} : vector<2x256xf32> to vector<2x64xf32>
    %118 = arith.negf %117 : vector<2x64xf32>
    %119 = math.exp %118 : vector<2x64xf32>
    %cst_40 = arith.constant 1.000000e+00 : f32
    %120 = vector.broadcast %cst_40 : f32 to vector<2x64xf32>
    %121 = arith.addf %120, %119 : vector<2x64xf32>
    %122 = arith.divf %120, %121 : vector<2x64xf32>
    %123 = arith.mulf %114, %116 : vector<2x64xf32>
    %124 = math.tanh %123 : vector<2x64xf32>
    %125 = arith.mulf %122, %124 : vector<2x64xf32>
    %126 = arith.truncf %125 : vector<2x64xf32> to vector<2x64xbf16>
    %c0_41 = arith.constant 0 : index
    %c0_42 = arith.constant 0 : index
    %127 = vector.load %arg4[%c0_41, %c0_42] : memref<64x128xbf16, #tpu.memory_space<vmem>>, vector<64x128xbf16>
    %cst_43 = arith.constant dense<0.000000e+00> : vector<2x128xf32>
    %128 = tpu.matmul %126, %127, %cst_43 {dimension_numbers = #tpu.dot_dimension_numbers<[1], [0], [0], [1], [0, 0, 1, 1], [], []>} : vector<2x64xbf16>, vector<64x128xbf16>, vector<2x128xf32> -> vector<2x128xf32>
    %c0_44 = arith.constant 0 : index
    %c0_45 = arith.constant 0 : index
    %129 = vector.load %arg5[%c0_44, %c0_45] : memref<1x128xf32, #tpu.memory_space<vmem>>, vector<1x128xf32>
    %130 = vector.broadcast %129 : vector<1x128xf32> to vector<2x128xf32>
    %131 = arith.addf %128, %130 : vector<2x128xf32>
    %cst_46 = arith.constant 0.000000e+00 : f32
    %132 = vector.broadcast %cst_46 : f32 to vector<2x128xf32>
    %133 = arith.maximumf %131, %132 : vector<2x128xf32>
    %134 = arith.truncf %133 : vector<2x128xf32> to vector<2x128xbf16>
    %c0_47 = arith.constant 0 : index
    %c0_48 = arith.constant 0 : index
    %135 = vector.load %arg6[%c0_47, %c0_48] : memref<128x32xbf16, #tpu.memory_space<vmem>>, vector<128x32xbf16>
    %cst_49 = arith.constant dense<0.000000e+00> : vector<2x32xf32>
    %136 = tpu.matmul %134, %135, %cst_49 {dimension_numbers = #tpu.dot_dimension_numbers<[1], [0], [0], [1], [0, 0, 1, 1], [], []>} : vector<2x128xbf16>, vector<128x32xbf16>, vector<2x32xf32> -> vector<2x32xf32>
    %c0_50 = arith.constant 0 : index
    %c0_51 = arith.constant 0 : index
    %137 = vector.load %arg7[%c0_50, %c0_51] : memref<1x32xf32, #tpu.memory_space<vmem>>, vector<1x32xf32>
    %138 = vector.broadcast %137 : vector<1x32xf32> to vector<2x32xf32>
    %139 = arith.addf %136, %138 : vector<2x32xf32>
    %c0_52 = arith.constant 0 : index
    %c0_53 = arith.constant 0 : index
    %140 = vector.load %arg8[%c0_52, %c0_53] : memref<2x32xf32, #tpu.memory_space<vmem>>, vector<2x32xf32>
    tpu.vector_store %arg8[%c0_52, %c0_53], %139 {strides = array<i32>} : memref<2x32xf32, #tpu.memory_space<vmem>>, vector<2x32xf32>,
    return
  }
}

</mosaic_0001>

<llo_original>
// kernel: lstm_model_forward.1
$region0: #{lstm_model_forward.1}
  #allocation0 [shape = 'u32[]', space=smem, size = 0x4, offset = 0x4, fixed_abs, tag = 'smem constant byte address 0x4 - core index']
  #allocation1 [shape = 'u32[144,128]{1,0:T(1,128)}', space=vmem, size = 0x12000, scoped, tag = 'internal scratch']
  %s0 = inlined_call_operand.vmem [shape: s32[2,1], index: 0, kind: input, shape index: {}]
  %s1 = inlined_call_operand.vmem [shape: f32[32,1,256], index: 1, kind: input, shape index: {}]
  %s2 = inlined_call_operand.hbm [shape: bf16[4,64,256], index: 2, kind: input, shape index: {}]
  %s3 = inlined_call_operand.hbm [shape: f32[4,1,256], index: 3, kind: input, shape index: {}]
  %s4 = inlined_call_operand.vmem [shape: bf16[64,128], index: 4, kind: input, shape index: {}]
  %s5 = inlined_call_operand.hbm [shape: f32[1,128], index: 5, kind: input, shape index: {}]
  %s6 = inlined_call_operand.vmem [shape: bf16[128,32], index: 6, kind: input, shape index: {}]
  %s7 = inlined_call_operand.hbm [shape: f32[1,32], index: 7, kind: input, shape index: {}]
  %s8 = inlined_call_operand.hbm [shape: f32[2,32], index: 8, kind: output, shape index: {}]
  %s9 = sld [smem:[#allocation0]]
  $region62: #{lstm_model_forward.1} parent=0
    _
  %s11 = ssub.s32 1, %s9
  %s12 = scalar_select 0, %s11, %s9
  $region1: #{lstm_model_forward.1} parent=0
    #allocation2 [shape = 'u8[1024]{0}', space=smem, size = 0x400, scoped, tag = 'input window, operand 0, single buffered']
    #allocation3 [shape = 's32[1]{0}', space=sflag, size = 0x4, scoped, tag = 'scoped memory for lstm_model_forward.1']
    #allocation4 [shape = 's32[1]{0}', space=sflag, size = 0x4, scoped, tag = 'scoped memory for lstm_model_forward.1']
    #allocation5 [shape = 's32[1]{0}', space=sflag, size = 0x4, scoped, tag = 'scoped memory for lstm_model_forward.1']
    #allocation6 [shape = 'u8[131072]{0}', space=vmem, size = 0x20000, scoped, tag = 'input window, operand 2, single buffered']
    #allocation7 [shape = 'u8[4096]{0}', space=vmem, size = 0x1000, scoped, tag = 'input window, operand 3, single buffered']
    #allocation8 [shape = 's32[1]{0}', space=sflag, size = 0x4, scoped, tag = 'scoped memory for lstm_model_forward.1']
    #allocation9 [shape = 'u8[512]{0}', space=vmem, size = 0x400, scoped, tag = 'input window, operand 5, single buffered']
    #allocation10 [shape = 'u8[512]{0}', space=vmem, size = 0x400, scoped, tag = 'input window, operand 7, single buffered']
    #allocation11 [shape = 's32[1]{0}', space=sflag, size = 0x4, scoped, tag = 'scoped memory for lstm_model_forward.1']
    #allocation12 [shape = 'u8[1024]{0}', space=vmem, size = 0x400, scoped, tag = 'output window, operand 0, single buffered']
    %13 = vsyncpa [#allocation5], 0
    %14 = vsyncpa [#allocation3], 0
    %15 = vsyncpa [#allocation8], 0
    %16 = vsyncpa [#allocation11], 0
    %17 = vsyncpa [#allocation4], 0
    // Predicated region
    $region2: #{lstm_model_forward.1} parent=1 // pred_check
      _
    $region3: #{lstm_model_forward.1} parent=1 // pred_check_branch
      %19 = sbr.rel (0) target = $region5
    $region4: #{lstm_model_forward.1} parent=1 // pred_region
      %s21 = ssub.s32 32, 32
      %22 = vsyncadd [#allocation5], %s21
      %s24 = sshll.u32 %s0, 4
      %s25 = int_to_ptr.vmem [resolvable:$true] %s24
      %27 = dma.vmem_to_smem %s25, 32, [#allocation2], [#allocation5]
    $region5: #{lstm_model_forward.1} parent=1 // pred_fallthru
      _
    // Predicated region
    $region6: #{lstm_model_forward.1} parent=1 // pred_check
      _
    $region7: #{lstm_model_forward.1} parent=1 // pred_check_branch
      %29 = sbr.rel (0) target = $region9
    $region8: #{lstm_model_forward.1} parent=1 // pred_region
      _
    $region9: #{lstm_model_forward.1} parent=1 // pred_fallthru
      _
    // Predicated region
    $region10: #{lstm_model_forward.1} parent=1 // pred_check
      _
    $region11: #{lstm_model_forward.1} parent=1 // pred_check_branch
      %31 = sbr.rel (0) target = $region13
    $region12: #{lstm_model_forward.1} parent=1 // pred_region
      %s33 = ssub.s32 4096, 4096
      %34 = vsyncadd [#allocation3], %s33
      %s35 = sshll.u32 [#allocation6], 4
      %s36 = int_to_ptr.vmem [resolvable:$true] %s35
      %41 = dma.hbm_to_vmem [thread:$0]  %s2, 4096, %s36, [#allocation3], 128, 128, 8
    $region13: #{lstm_model_forward.1} parent=1 // pred_fallthru
      _
    // Predicated region
    $region14: #{lstm_model_forward.1} parent=1 // pred_check
      _
    $region15: #{lstm_model_forward.1} parent=1 // pred_check_branch
      %43 = sbr.rel (0) target = $region17
    $region16: #{lstm_model_forward.1} parent=1 // pred_region
      %s45 = ssub.s32 128, 128
      %46 = vsyncadd [#allocation8], %s45
      %s47 = sshll.u32 [#allocation7], 4
      %s48 = int_to_ptr.vmem [resolvable:$true] %s47
      %53 = dma.hbm_to_vmem [thread:$0]  %s3, 128, %s48, [#allocation8], 32, 32, 2
    $region17: #{lstm_model_forward.1} parent=1 // pred_fallthru
      _
    // Predicated region
    $region18: #{lstm_model_forward.1} parent=1 // pred_check
      _
    $region19: #{lstm_model_forward.1} parent=1 // pred_check_branch
      %55 = sbr.rel (0) target = $region21
    $region20: #{lstm_model_forward.1} parent=1 // pred_region
      _
    $region21: #{lstm_model_forward.1} parent=1 // pred_fallthru
      _
    // Predicated region
    $region22: #{lstm_model_forward.1} parent=1 // pred_check
      _
    $region23: #{lstm_model_forward.1} parent=1 // pred_check_branch
      %57 = sbr.rel (0) target = $region25
    $region24: #{lstm_model_forward.1} parent=1 // pred_region
      %s59 = ssub.s32 16, 16
      %60 = vsyncadd [#allocation8], %s59
      %s62 = sshll.u32 [#allocation9], 4
      %s63 = int_to_ptr.vmem [resolvable:$true] %s62
      %65 = dma.hbm_to_vmem [thread:$0]  %s5, 16, %s63, [#allocation8]
    $region25: #{lstm_model_forward.1} parent=1 // pred_fallthru
      _
    // Predicated region
    $region26: #{lstm_model_forward.1} parent=1 // pred_check
      _
    $region27: #{lstm_model_forward.1} parent=1 // pred_check_branch
      %67 = sbr.rel (0) target = $region29
    $region28: #{lstm_model_forward.1} parent=1 // pred_region
      _
    $region29: #{lstm_model_forward.1} parent=1 // pred_fallthru
      _
    // Predicated region
    $region30: #{lstm_model_forward.1} parent=1 // pred_check
      _
    $region31: #{lstm_model_forward.1} parent=1 // pred_check_branch
      %69 = sbr.rel (0) target = $region33
    $region32: #{lstm_model_forward.1} parent=1 // pred_region
      %s71 = ssub.s32 16, 16
      %72 = vsyncadd [#allocation11], %s71
      %s74 = sshll.u32 [#allocation10], 4
      %s75 = int_to_ptr.vmem [resolvable:$true] %s74
      %77 = dma.hbm_to_vmem [thread:$0]  %s7, 16, %s75, [#allocation11]
    $region33: #{lstm_model_forward.1} parent=1 // pred_fallthru
      _
    // Predicated region
    $region34: #{lstm_model_forward.1} parent=1 // pred_check
      _
    $region35: #{lstm_model_forward.1} parent=1 // pred_check_branch
      %79 = sbr.rel (0) target = $region37
    $region36: #{lstm_model_forward.1} parent=1 // pred_region
      %80 = dma.done [#allocation5], 32
    $region37: #{lstm_model_forward.1} parent=1 // pred_fallthru
      _
    // Predicated region
    $region38: #{lstm_model_forward.1} parent=1 // pred_check
      _
    $region39: #{lstm_model_forward.1} parent=1 // pred_check_branch
      %82 = sbr.rel (0) target = $region41
    $region40: #{lstm_model_forward.1} parent=1 // pred_region
      %83 = dma.done [#allocation3], 4096
    $region41: #{lstm_model_forward.1} parent=1 // pred_fallthru
      _
    // Predicated region
    $region42: #{lstm_model_forward.1} parent=1 // pred_check
      _
    $region43: #{lstm_model_forward.1} parent=1 // pred_check_branch
      %85 = sbr.rel (0) target = $region45
    $region44: #{lstm_model_forward.1} parent=1 // pred_region
      %86 = dma.done [#allocation8], 128
    $region45: #{lstm_model_forward.1} parent=1 // pred_fallthru
      _
    // Predicated region
    $region46: #{lstm_model_forward.1} parent=1 // pred_check
      _
    $region47: #{lstm_model_forward.1} parent=1 // pred_check_branch
      %88 = sbr.rel (0) target = $region49
    $region48: #{lstm_model_forward.1} parent=1 // pred_region
      %89 = dma.done [#allocation8], 16
    $region49: #{lstm_model_forward.1} parent=1 // pred_fallthru
      _
    // Predicated region
    $region50: #{lstm_model_forward.1} parent=1 // pred_check
      _
    $region51: #{lstm_model_forward.1} parent=1 // pred_check_branch
      %91 = sbr.rel (0) target = $region53
    $region52: #{lstm_model_forward.1} parent=1 // pred_region
      %92 = dma.done [#allocation11], 16
    $region53: #{lstm_model_forward.1} parent=1 // pred_fallthru
      _
    %93 = sfence
    %s95 = sld [smem:[#allocation2]]
    %s96 = smul.u32 %s95, 2
    %s97 = scalar_lea.vmem %s1, %s96
    %v98 = vld [vmem:[%s97] sm:$0x3]
    %s99 = sld [smem:[#allocation2 + $0x80]]
    %s100 = smul.u32 %s99, 2
    %s101 = scalar_lea.vmem %s1, %s100
    %v102 = vld [vmem:[%s101] sm:$0x3]
    %v104 = vlaneseq
    %v105 = vshrl.u32 %v104, 7
    %v106 = vsub.s32 0, %v105
    %v107 = vrot.slane %v98, %v106
    %v108 = vlaneseq
    %v109 = vshrl.u32 %v108, 7
    %v110 = vsub.s32 1, %v109
    %v111 = vrot.slane %v98, %v110
    %v115 = vlaneseq
    %v116 = vshrl.u32 %v115, 7
    %v117 = vsub.s32 0, %v116
    %v118 = vrot.slane %v102, %v117
    %v119 = vlaneseq
    %v120 = vshrl.u32 %v119, 7
    %v121 = vsub.s32 1, %v120
    %v122 = vrot.slane %v102, %v121
    %vm125 = vcmask 1040384
    %v126 = vsel %vm125, %v107, %v118
    %v127 = vsel %vm125, %v111, %v122
    %v128 = vxor.u32 %v126, 2147483648
    %v129 = vmul.f32 %v128, 1.442695
    %v130 = vpow.pop %v129
    %v131 = vadd.f32 %v130, 1.0
    %v132 = vrcp.pop %v131
    %v133 = vmul.f32 1.0, %v132
    %v134 = vtanh.pop %v126
    %v135 = vxor.u32 %v127, 2147483648
    %v136 = vmul.f32 %v135, 1.442695
    %v137 = vpow.pop %v136
    %v138 = vadd.f32 %v137, 1.0
    %v139 = vrcp.pop %v138
    %v140 = vmul.f32 1.0, %v139
    %142 = vrot.lane.b32.xlu0 %v134, 64
    %v143 = vpop.permute.xlu0 %142
    %v145 = vmul.f32 %v133, %v143
    %v146 = vtanh.pop %v145
    %v147 = vmul.f32 %v140, %v146
    %v148 = vpack.c.bf16 %v147, %v147
    %v149 = vld [vmem:[#allocation6] sm:$0xff]
    %v150 = vld [vmem:[#allocation6 + $0x8] sm:$0xff]
    %v151 = vld [vmem:[#allocation6 + $0x10] sm:$0xff]
    %v152 = vld [vmem:[#allocation6 + $0x18] sm:$0xff]
    %v153 = vld [vmem:[#allocation6 + $0x20] sm:$0xff]
    %v154 = vld [vmem:[#allocation6 + $0x28] sm:$0xff]
    %v155 = vld [vmem:[#allocation6 + $0x30] sm:$0xff]
    %v156 = vld [vmem:[#allocation6 + $0x38] sm:$0xff]
    %v157 = vld [vmem:[#allocation7] sm:$0x3]
    %v159 = vlaneseq
    %v160 = vshrl.u32 %v159, 7
    %v161 = vsub.s32 0, %v160
    %v162 = vrot.slane %v157, %v161
    %v163 = vlaneseq
    %v164 = vshrl.u32 %v163, 7
    %v165 = vsub.s32 1, %v164
    %v166 = vrot.slane %v157, %v165
    %v177 = vunpack.c.l.b16 %v149
    %v178 = vunpack.c.h.b16 %v149
    %v179 = vunpack.c.l.b16 %v150
    %v180 = vunpack.c.h.b16 %v150
    %v181 = vunpack.c.l.b16 %v151
    %v182 = vunpack.c.h.b16 %v151
    %v183 = vunpack.c.l.b16 %v152
    %v184 = vunpack.c.h.b16 %v152
    %v185 = vunpack.c.l.b16 %v153
    %v186 = vunpack.c.h.b16 %v153
    %v187 = vunpack.c.l.b16 %v154
    %v188 = vunpack.c.h.b16 %v154
    %v189 = vunpack.c.l.b16 %v155
    %v190 = vunpack.c.h.b16 %v155
    %v191 = vunpack.c.l.b16 %v156
    %v192 = vunpack.c.h.b16 %v156
    %v193 = vpack.c.b16 %v179, %v177
    %v194 = vpack.c.b16 %v180, %v178
    %v195 = vpack.c.b16 %v183, %v181
    %v196 = vpack.c.b16 %v184, %v182
    %v197 = vpack.c.b16 %v187, %v185
    %v198 = vpack.c.b16 %v188, %v186
    %v199 = vpack.c.b16 %v191, %v189
    %v200 = vpack.c.b16 %v192, %v190
    %vm209 = vcmask 523264
    %v211 = vsel %vm209, %v148, 0
    %213 = vmatprep.subr.bf16.mxu0 0
    %214 = vmatpush1.bf16.msra.mxu0 0
    %215 = vmatprep.subr.bf16.mxu0 0
    %216 = vmatpush1.bf16.msra.mxu0 0
    %217 = vmatprep.subr.bf16.mxu0 0
    %218 = vmatpush1.bf16.msra.mxu0 0
    %219 = vmatprep.subr.bf16.mxu0 0
    %220 = vmatpush1.bf16.msra.mxu0 0
    %221 = vmatprep.subr.bf16.mxu0 %v200
    %222 = vmatpush1.bf16.msra.mxu0 %v199
    %223 = vmatprep.subr.bf16.mxu0 %v198
    %224 = vmatpush1.bf16.msra.mxu0 %v197
    %225 = vmatprep.subr.bf16.mxu0 %v196
    %226 = vmatpush1.bf16.msra.mxu0 %v195
    %227 = vmatprep.subr.bf16.mxu0 %v194
    %228 = vmatpush1.bf16.msra.mxu0 %v193
    %229 = vmatprep.subr.bf16.mxu0 0
    %230 = vmatpush2.bf16.msra.mxu0 0
    %231 = vmatprep.subr.bf16.mxu0 0
    %232 = vmatpush2.bf16.msra.mxu0 0
    %233 = vmatprep.subr.bf16.mxu0 0
    %234 = vmatpush2.bf16.msra.mxu0 0
    %235 = vmatprep.subr.bf16.mxu0 0
    %236 = vmatpush2.bf16.msra.mxu0 0
    %237 = vmatprep.subr.bf16.mxu0 0
    %238 = vmatpush2.bf16.msra.mxu0 0
    %239 = vmatprep.subr.bf16.mxu0 0
    %240 = vmatpush2.bf16.msra.mxu0 0
    %241 = vmatprep.subr.bf16.mxu0 0
    %242 = vmatpush2.bf16.msra.mxu0 0
    %243 = vmatprep.subr.bf16.mxu0 0
    %244 = vmatpush2.bf16.msra.mxu0 0
    %245 = vmatprep.mubr.bf16.mxu0 0
    %246 = vmatmul.mubr.bf16.gmra.mxu0 %v211
    %v247 = vpop.f32.mrf.mxu0
    %v248 = vadd.f32 %v162, %v247
    %v249 = vpop.f32.mrf.mxu0
    %v250 = vadd.f32 %v166, %v249
    %v251 = vpop.f32.mrf.mxu0
    %v252 = vpop.f32.mrf.mxu0
    %253 = vdwg.mxu0
    %v254 = vxor.u32 %v248, 2147483648
    %v255 = vmul.f32 %v254, 1.442695
    %v256 = vpow.pop %v255
    %v257 = vadd.f32 %v256, 1.0
    %v258 = vrcp.pop %v257
    %v259 = vmul.f32 1.0, %v258
    %v260 = vtanh.pop %v248
    %v261 = vxor.u32 %v250, 2147483648
    %v262 = vmul.f32 %v261, 1.442695
    %v263 = vpow.pop %v262
    %v264 = vadd.f32 %v263, 1.0
    %v265 = vrcp.pop %v264
    %v266 = vmul.f32 1.0, %v265
    %268 = vrot.lane.b32.xlu0 %v260, 64
    %v269 = vpop.permute.xlu0 %268
    %v271 = vmul.f32 %v259, %v269
    %v272 = vtanh.pop %v271
    %v273 = vmul.f32 %v266, %v272
    %v274 = vpack.c.bf16 %v273, %v273
    %s275 = scalar_lea.vmem [#allocation6], 64
    %v276 = vld [vmem:[%s275] sm:$0xff]
    %v277 = vld [vmem:[%s275 + $0x8] sm:$0xff]
    %v278 = vld [vmem:[%s275 + $0x10] sm:$0xff]
    %v279 = vld [vmem:[%s275 + $0x18] sm:$0xff]
    %v280 = vld [vmem:[%s275 + $0x20] sm:$0xff]
    %v281 = vld [vmem:[%s275 + $0x28] sm:$0xff]
    %v282 = vld [vmem:[%s275 + $0x30] sm:$0xff]
    %v283 = vld [vmem:[%s275 + $0x38] sm:$0xff]
    %s284 = scalar_lea.vmem [#allocation7], 2
    %v285 = vld [vmem:[%s284] sm:$0x3]
    %v287 = vlaneseq
    %v288 = vshrl.u32 %v287, 7
    %v289 = vsub.s32 0, %v288
    %v290 = vrot.slane %v285, %v289
    %v291 = vlaneseq
    %v292 = vshrl.u32 %v291, 7
    %v293 = vsub.s32 1, %v292
    %v294 = vrot.slane %v285, %v293
    %v305 = vunpack.c.l.b16 %v276
    %v306 = vunpack.c.h.b16 %v276
    %v307 = vunpack.c.l.b16 %v277
    %v308 = vunpack.c.h.b16 %v277
    %v309 = vunpack.c.l.b16 %v278
    %v310 = vunpack.c.h.b16 %v278
    %v311 = vunpack.c.l.b16 %v279
    %v312 = vunpack.c.h.b16 %v279
    %v313 = vunpack.c.l.b16 %v280
    %v314 = vunpack.c.h.b16 %v280
    %v315 = vunpack.c.l.b16 %v281
    %v316 = vunpack.c.h.b16 %v281
    %v317 = vunpack.c.l.b16 %v282
    %v318 = vunpack.c.h.b16 %v282
    %v319 = vunpack.c.l.b16 %v283
    %v320 = vunpack.c.h.b16 %v283
    %v321 = vpack.c.b16 %v307, %v305
    %v322 = vpack.c.b16 %v308, %v306
    %v323 = vpack.c.b16 %v311, %v309
    %v324 = vpack.c.b16 %v312, %v310
    %v325 = vpack.c.b16 %v315, %v313
    %v326 = vpack.c.b16 %v316, %v314
    %v327 = vpack.c.b16 %v319, %v317
    %v328 = vpack.c.b16 %v320, %v318
    %v338 = vsel %vm209, %v274, 0
    %340 = vmatprep.subr.bf16.mxu0 0
    %341 = vmatpush1.bf16.msra.mxu0 0
    %342 = vmatprep.subr.bf16.mxu0 0
    %343 = vmatpush1.bf16.msra.mxu0 0
    %344 = vmatprep.subr.bf16.mxu0 0
    %345 = vmatpush1.bf16.msra.mxu0 0
    %346 = vmatprep.subr.bf16.mxu0 0
    %347 = vmatpush1.bf16.msra.mxu0 0
    %348 = vmatprep.subr.bf16.mxu0 %v328
    %349 = vmatpush1.bf16.msra.mxu0 %v327
    %350 = vmatprep.subr.bf16.mxu0 %v326
    %351 = vmatpush1.bf16.msra.mxu0 %v325
    %352 = vmatprep.subr.bf16.mxu0 %v324
    %353 = vmatpush1.bf16.msra.mxu0 %v323
    %354 = vmatprep.subr.bf16.mxu0 %v322
    %355 = vmatpush1.bf16.msra.mxu0 %v321
    %356 = vmatprep.subr.bf16.mxu0 0
    %357 = vmatpush2.bf16.msra.mxu0 0
    %358 = vmatprep.subr.bf16.mxu0 0
    %359 = vmatpush2.bf16.msra.mxu0 0
    %360 = vmatprep.subr.bf16.mxu0 0
    %361 = vmatpush2.bf16.msra.mxu0 0
    %362 = vmatprep.subr.bf16.mxu0 0
    %363 = vmatpush2.bf16.msra.mxu0 0
    %364 = vmatprep.subr.bf16.mxu0 0
    %365 = vmatpush2.bf16.msra.mxu0 0
    %366 = vmatprep.subr.bf16.mxu0 0
    %367 = vmatpush2.bf16.msra.mxu0 0
    %368 = vmatprep.subr.bf16.mxu0 0
    %369 = vmatpush2.bf16.msra.mxu0 0
    %370 = vmatprep.subr.bf16.mxu0 0
    %371 = vmatpush2.bf16.msra.mxu0 0
    %372 = vmatprep.mubr.bf16.mxu0 0
    %373 = vmatmul.mubr.bf16.gmra.mxu0 %v338
    %v374 = vpop.f32.mrf.mxu0
    %v375 = vadd.f32 %v290, %v374
    %v376 = vpop.f32.mrf.mxu0
    %v377 = vadd.f32 %v294, %v376
    %v378 = vpop.f32.mrf.mxu0
    %v379 = vpop.f32.mrf.mxu0
    %380 = vdwg.mxu0
    %v381 = vxor.u32 %v375, 2147483648
    %v382 = vmul.f32 %v381, 1.442695
    %v383 = vpow.pop %v382
    %v384 = vadd.f32 %v383, 1.0
    %v385 = vrcp.pop %v384
    %v386 = vmul.f32 1.0, %v385
    %v387 = vtanh.pop %v375
    %v388 = vxor.u32 %v377, 2147483648
    %v389 = vmul.f32 %v388, 1.442695
    %v390 = vpow.pop %v389
    %v391 = vadd.f32 %v390, 1.0
    %v392 = vrcp.pop %v391
    %v393 = vmul.f32 1.0, %v392
    %395 = vrot.lane.b32.xlu0 %v387, 64
    %v396 = vpop.permute.xlu0 %395
    %v398 = vmul.f32 %v386, %v396
    %v399 = vtanh.pop %v398
    %v400 = vmul.f32 %v393, %v399
    %v401 = vpack.c.bf16 %v400, %v400
    %s402 = scalar_lea.vmem [#allocation6], 128
    %v403 = vld [vmem:[%s402] sm:$0xff]
    %v404 = vld [vmem:[%s402 + $0x8] sm:$0xff]
    %v405 = vld [vmem:[%s402 + $0x10] sm:$0xff]
    %v406 = vld [vmem:[%s402 + $0x18] sm:$0xff]
    %v407 = vld [vmem:[%s402 + $0x20] sm:$0xff]
    %v408 = vld [vmem:[%s402 + $0x28] sm:$0xff]
    %v409 = vld [vmem:[%s402 + $0x30] sm:$0xff]
    %v410 = vld [vmem:[%s402 + $0x38] sm:$0xff]
    %s411 = scalar_lea.vmem [#allocation7], 4
    %v412 = vld [vmem:[%s411] sm:$0x3]
    %v414 = vlaneseq
    %v415 = vshrl.u32 %v414, 7
    %v416 = vsub.s32 0, %v415
    %v417 = vrot.slane %v412, %v416
    %v418 = vlaneseq
    %v419 = vshrl.u32 %v418, 7
    %v420 = vsub.s32 1, %v419
    %v421 = vrot.slane %v412, %v420
    %v432 = vunpack.c.l.b16 %v403
    %v433 = vunpack.c.h.b16 %v403
    %v434 = vunpack.c.l.b16 %v404
    %v435 = vunpack.c.h.b16 %v404
    %v436 = vunpack.c.l.b16 %v405
    %v437 = vunpack.c.h.b16 %v405
    %v438 = vunpack.c.l.b16 %v406
    %v439 = vunpack.c.h.b16 %v406
    %v440 = vunpack.c.l.b16 %v407
    %v441 = vunpack.c.h.b16 %v407
    %v442 = vunpack.c.l.b16 %v408
    %v443 = vunpack.c.h.b16 %v408
    %v444 = vunpack.c.l.b16 %v409
    %v445 = vunpack.c.h.b16 %v409
    %v446 = vunpack.c.l.b16 %v410
    %v447 = vunpack.c.h.b16 %v410
    %v448 = vpack.c.b16 %v434, %v432
    %v449 = vpack.c.b16 %v435, %v433
    %v450 = vpack.c.b16 %v438, %v436
    %v451 = vpack.c.b16 %v439, %v437
    %v452 = vpack.c.b16 %v442, %v440
    %v453 = vpack.c.b16 %v443, %v441
    %v454 = vpack.c.b16 %v446, %v444
    %v455 = vpack.c.b16 %v447, %v445
    %v465 = vsel %vm209, %v401, 0
    %467 = vmatprep.subr.bf16.mxu0 0
    %468 = vmatpush1.bf16.msra.mxu0 0
    %469 = vmatprep.subr.bf16.mxu0 0
    %470 = vmatpush1.bf16.msra.mxu0 0
    %471 = vmatprep.subr.bf16.mxu0 0
    %472 = vmatpush1.bf16.msra.mxu0 0
    %473 = vmatprep.subr.bf16.mxu0 0
    %474 = vmatpush1.bf16.msra.mxu0 0
    %475 = vmatprep.subr.bf16.mxu0 %v455
    %476 = vmatpush1.bf16.msra.mxu0 %v454
    %477 = vmatprep.subr.bf16.mxu0 %v453
    %478 = vmatpush1.bf16.msra.mxu0 %v452
    %479 = vmatprep.subr.bf16.mxu0 %v451
    %480 = vmatpush1.bf16.msra.mxu0 %v450
    %481 = vmatprep.subr.bf16.mxu0 %v449
    %482 = vmatpush1.bf16.msra.mxu0 %v448
    %483 = vmatprep.subr.bf16.mxu0 0
    %484 = vmatpush2.bf16.msra.mxu0 0
    %485 = vmatprep.subr.bf16.mxu0 0
    %486 = vmatpush2.bf16.msra.mxu0 0
    %487 = vmatprep.subr.bf16.mxu0 0
    %488 = vmatpush2.bf16.msra.mxu0 0
    %489 = vmatprep.subr.bf16.mxu0 0
    %490 = vmatpush2.bf16.msra.mxu0 0
    %491 = vmatprep.subr.bf16.mxu0 0
    %492 = vmatpush2.bf16.msra.mxu0 0
    %493 = vmatprep.subr.bf16.mxu0 0
    %494 = vmatpush2.bf16.msra.mxu0 0
    %495 = vmatprep.subr.bf16.mxu0 0
    %496 = vmatpush2.bf16.msra.mxu0 0
    %497 = vmatprep.subr.bf16.mxu0 0
    %498 = vmatpush2.bf16.msra.mxu0 0
    %499 = vmatprep.mubr.bf16.mxu0 0
    %500 = vmatmul.mubr.bf16.gmra.mxu0 %v465
    %v501 = vpop.f32.mrf.mxu0
    %v502 = vadd.f32 %v417, %v501
    %v503 = vpop.f32.mrf.mxu0
    %v504 = vadd.f32 %v421, %v503
    %v505 = vpop.f32.mrf.mxu0
    %v506 = vpop.f32.mrf.mxu0
    %507 = vdwg.mxu0
    %v508 = vxor.u32 %v502, 2147483648
    %v509 = vmul.f32 %v508, 1.442695
    %v510 = vpow.pop %v509
    %v511 = vadd.f32 %v510, 1.0
    %v512 = vrcp.pop %v511
    %v513 = vmul.f32 1.0, %v512
    %v514 = vtanh.pop %v502
    %v515 = vxor.u32 %v504, 2147483648
    %v516 = vmul.f32 %v515, 1.442695
    %v517 = vpow.pop %v516
    %v518 = vadd.f32 %v517, 1.0
    %v519 = vrcp.pop %v518
    %v520 = vmul.f32 1.0, %v519
    %522 = vrot.lane.b32.xlu0 %v514, 64
    %v523 = vpop.permute.xlu0 %522
    %v525 = vmul.f32 %v513, %v523
    %v526 = vtanh.pop %v525
    %v527 = vmul.f32 %v520, %v526
    %v528 = vpack.c.bf16 %v527, %v527
    %s529 = scalar_lea.vmem [#allocation6], 192
    %v530 = vld [vmem:[%s529] sm:$0xff]
    %v531 = vld [vmem:[%s529 + $0x8] sm:$0xff]
    %v532 = vld [vmem:[%s529 + $0x10] sm:$0xff]
    %v533 = vld [vmem:[%s529 + $0x18] sm:$0xff]
    %v534 = vld [vmem:[%s529 + $0x20] sm:$0xff]
    %v535 = vld [vmem:[%s529 + $0x28] sm:$0xff]
    %v536 = vld [vmem:[%s529 + $0x30] sm:$0xff]
    %v537 = vld [vmem:[%s529 + $0x38] sm:$0xff]
    %s538 = scalar_lea.vmem [#allocation7], 6
    %v539 = vld [vmem:[%s538] sm:$0x3]
    %v541 = vlaneseq
    %v542 = vshrl.u32 %v541, 7
    %v543 = vsub.s32 0, %v542
    %v544 = vrot.slane %v539, %v543
    %v545 = vlaneseq
    %v546 = vshrl.u32 %v545, 7
    %v547 = vsub.s32 1, %v546
    %v548 = vrot.slane %v539, %v547
    %v559 = vunpack.c.l.b16 %v530
    %v560 = vunpack.c.h.b16 %v530
    %v561 = vunpack.c.l.b16 %v531
    %v562 = vunpack.c.h.b16 %v531
    %v563 = vunpack.c.l.b16 %v532
    %v564 = vunpack.c.h.b16 %v532
    %v565 = vunpack.c.l.b16 %v533
    %v566 = vunpack.c.h.b16 %v533
    %v567 = vunpack.c.l.b16 %v534
    %v568 = vunpack.c.h.b16 %v534
    %v569 = vunpack.c.l.b16 %v535
    %v570 = vunpack.c.h.b16 %v535
    %v571 = vunpack.c.l.b16 %v536
    %v572 = vunpack.c.h.b16 %v536
    %v573 = vunpack.c.l.b16 %v537
    %v574 = vunpack.c.h.b16 %v537
    %v575 = vpack.c.b16 %v561, %v559
    %v576 = vpack.c.b16 %v562, %v560
    %v577 = vpack.c.b16 %v565, %v563
    %v578 = vpack.c.b16 %v566, %v564
    %v579 = vpack.c.b16 %v569, %v567
    %v580 = vpack.c.b16 %v570, %v568
    %v581 = vpack.c.b16 %v573, %v571
    %v582 = vpack.c.b16 %v574, %v572
    %v592 = vsel %vm209, %v528, 0
    %594 = vmatprep.subr.bf16.mxu0 0
    %595 = vmatpush1.bf16.msra.mxu0 0
    %596 = vmatprep.subr.bf16.mxu0 0
    %597 = vmatpush1.bf16.msra.mxu0 0
    %598 = vmatprep.subr.bf16.mxu0 0
    %599 = vmatpush1.bf16.msra.mxu0 0
    %600 = vmatprep.subr.bf16.mxu0 0
    %601 = vmatpush1.bf16.msra.mxu0 0
    %602 = vmatprep.subr.bf16.mxu0 %v582
    %603 = vmatpush1.bf16.msra.mxu0 %v581
    %604 = vmatprep.subr.bf16.mxu0 %v580
    %605 = vmatpush1.bf16.msra.mxu0 %v579
    %606 = vmatprep.subr.bf16.mxu0 %v578
    %607 = vmatpush1.bf16.msra.mxu0 %v577
    %608 = vmatprep.subr.bf16.mxu0 %v576
    %609 = vmatpush1.bf16.msra.mxu0 %v575
    %610 = vmatprep.subr.bf16.mxu0 0
    %611 = vmatpush2.bf16.msra.mxu0 0
    %612 = vmatprep.subr.bf16.mxu0 0
    %613 = vmatpush2.bf16.msra.mxu0 0
    %614 = vmatprep.subr.bf16.mxu0 0
    %615 = vmatpush2.bf16.msra.mxu0 0
    %616 = vmatprep.subr.bf16.mxu0 0
    %617 = vmatpush2.bf16.msra.mxu0 0
    %618 = vmatprep.subr.bf16.mxu0 0
    %619 = vmatpush2.bf16.msra.mxu0 0
    %620 = vmatprep.subr.bf16.mxu0 0
    %621 = vmatpush2.bf16.msra.mxu0 0
    %622 = vmatprep.subr.bf16.mxu0 0
    %623 = vmatpush2.bf16.msra.mxu0 0
    %624 = vmatprep.subr.bf16.mxu0 0
    %625 = vmatpush2.bf16.msra.mxu0 0
    %626 = vmatprep.mubr.bf16.mxu0 0
    %627 = vmatmul.mubr.bf16.gmra.mxu0 %v592
    %v628 = vpop.f32.mrf.mxu0
    %v629 = vadd.f32 %v544, %v628
    %v630 = vpop.f32.mrf.mxu0
    %v631 = vadd.f32 %v548, %v630
    %v632 = vpop.f32.mrf.mxu0
    %v633 = vpop.f32.mrf.mxu0
    %634 = vdwg.mxu0
    %v635 = vxor.u32 %v629, 2147483648
    %v636 = vmul.f32 %v635, 1.442695
    %v637 = vpow.pop %v636
    %v638 = vadd.f32 %v637, 1.0
    %v639 = vrcp.pop %v638
    %v640 = vmul.f32 1.0, %v639
    %v641 = vtanh.pop %v629
    %v642 = vxor.u32 %v631, 2147483648
    %v643 = vmul.f32 %v642, 1.442695
    %v644 = vpow.pop %v643
    %v645 = vadd.f32 %v644, 1.0
    %v646 = vrcp.pop %v645
    %v647 = vmul.f32 1.0, %v646
    %649 = vrot.lane.b32.xlu0 %v641, 64
    %v650 = vpop.permute.xlu0 %649
    %v652 = vmul.f32 %v640, %v650
    %v653 = vtanh.pop %v652
    %v654 = vmul.f32 %v647, %v653
    %v655 = vpack.c.bf16 %v654, %v654
    %v656 = vld [vmem:[%s4] sm:$0xf]
    %v657 = vld [vmem:[%s4 + $0x4] sm:$0xf]
    %v658 = vld [vmem:[%s4 + $0x8] sm:$0xf]
    %v659 = vld [vmem:[%s4 + $0xc] sm:$0xf]
    %v660 = vld [vmem:[%s4 + $0x10] sm:$0xf]
    %v661 = vld [vmem:[%s4 + $0x14] sm:$0xf]
    %v662 = vld [vmem:[%s4 + $0x18] sm:$0xf]
    %v663 = vld [vmem:[%s4 + $0x1c] sm:$0xf]
    %v664 = vld [vmem:[#allocation9] sm:$0x1]
    %v666 = vlaneseq
    %v667 = vshrl.u32 %v666, 7
    %v668 = vsub.s32 0, %v667
    %v669 = vrot.slane %v664, %v668
    %v679 = vunpack.c.l.b16 %v656
    %v680 = vunpack.c.l.b16 %v657
    %v681 = vunpack.c.l.b16 %v658
    %v682 = vunpack.c.l.b16 %v659
    %v683 = vunpack.c.l.b16 %v660
    %v684 = vunpack.c.l.b16 %v661
    %v685 = vunpack.c.l.b16 %v662
    %v686 = vunpack.c.l.b16 %v663
    %v687 = vpack.c.b16 %v680, %v679
    %v688 = vpack.c.b16 %v682, %v681
    %v689 = vpack.c.b16 %v684, %v683
    %v690 = vpack.c.b16 %v686, %v685
    %v696 = vsel %vm209, %v655, 0
    %698 = vmatprep.subr.bf16.mxu0 0
    %699 = vmatpush1.bf16.msra.mxu0 0
    %700 = vmatprep.subr.bf16.mxu0 0
    %701 = vmatpush1.bf16.msra.mxu0 0
    %702 = vmatprep.subr.bf16.mxu0 0
    %703 = vmatpush1.bf16.msra.mxu0 0
    %704 = vmatprep.subr.bf16.mxu0 0
    %705 = vmatpush1.bf16.msra.mxu0 0
    %706 = vmatprep.subr.bf16.mxu0 0
    %707 = vmatpush1.bf16.msra.mxu0 %v690
    %708 = vmatprep.subr.bf16.mxu0 0
    %709 = vmatpush1.bf16.msra.mxu0 %v689
    %710 = vmatprep.subr.bf16.mxu0 0
    %711 = vmatpush1.bf16.msra.mxu0 %v688
    %712 = vmatprep.subr.bf16.mxu0 0
    %713 = vmatpush1.bf16.msra.mxu0 %v687
    %714 = vmatprep.subr.bf16.mxu0 0
    %715 = vmatpush2.bf16.msra.mxu0 0
    %716 = vmatprep.subr.bf16.mxu0 0
    %717 = vmatpush2.bf16.msra.mxu0 0
    %718 = vmatprep.subr.bf16.mxu0 0
    %719 = vmatpush2.bf16.msra.mxu0 0
    %720 = vmatprep.subr.bf16.mxu0 0
    %721 = vmatpush2.bf16.msra.mxu0 0
    %722 = vmatprep.subr.bf16.mxu0 0
    %723 = vmatpush2.bf16.msra.mxu0 0
    %724 = vmatprep.subr.bf16.mxu0 0
    %725 = vmatpush2.bf16.msra.mxu0 0
    %726 = vmatprep.subr.bf16.mxu0 0
    %727 = vmatpush2.bf16.msra.mxu0 0
    %728 = vmatprep.subr.bf16.mxu0 0
    %729 = vmatpush2.bf16.msra.mxu0 0
    %730 = vmatprep.mubr.bf16.mxu0 0
    %731 = vmatmul.mubr.bf16.gmra.mxu0 %v696
    %v732 = vpop.f32.mrf.mxu0
    %v733 = vadd.f32 %v669, %v732
    %v734 = vpop.f32.mrf.mxu0
    %v735 = vpop.f32.mrf.mxu0
    %v736 = vpop.f32.mrf.mxu0
    %737 = vdwg.mxu0
    %v738 = vmax.f32 %v733, 0.0
    %v739 = vpack.c.bf16 %v738, %v738
    %v740 = vld [vmem:[%s6] sm:$0xf]
    %v741 = vld [vmem:[%s6 + $0x4] sm:$0xf]
    %v742 = vld [vmem:[%s6 + $0x8] sm:$0xf]
    %v743 = vld [vmem:[%s6 + $0xc] sm:$0xf]
    %v744 = vld [vmem:[%s6 + $0x10] sm:$0xf]
    %v745 = vld [vmem:[%s6 + $0x14] sm:$0xf]
    %v746 = vld [vmem:[%s6 + $0x18] sm:$0xf]
    %v747 = vld [vmem:[%s6 + $0x1c] sm:$0xf]
    %v748 = vld [vmem:[%s6 + $0x20] sm:$0xf]
    %v749 = vld [vmem:[%s6 + $0x24] sm:$0xf]
    %v750 = vld [vmem:[%s6 + $0x28] sm:$0xf]
    %v751 = vld [vmem:[%s6 + $0x2c] sm:$0xf]
    %v752 = vld [vmem:[%s6 + $0x30] sm:$0xf]
    %v753 = vld [vmem:[%s6 + $0x34] sm:$0xf]
    %v754 = vld [vmem:[%s6 + $0x38] sm:$0xf]
    %v755 = vld [vmem:[%s6 + $0x3c] sm:$0xf]
    %v756 = vld [vmem:[#allocation10] sm:$0x1]
    %v758 = vlaneseq
    %v759 = vshrl.u32 %v758, 7
    %v760 = vsub.s32 0, %v759
    %v761 = vrot.slane %v756, %v760
    %v779 = vunpack.c.l.b16 %v740
    %v780 = vunpack.c.l.b16 %v741
    %v781 = vunpack.c.l.b16 %v742
    %v782 = vunpack.c.l.b16 %v743
    %v783 = vunpack.c.l.b16 %v744
    %v784 = vunpack.c.l.b16 %v745
    %v785 = vunpack.c.l.b16 %v746
    %v786 = vunpack.c.l.b16 %v747
    %v787 = vunpack.c.l.b16 %v748
    %v788 = vunpack.c.l.b16 %v749
    %v789 = vunpack.c.l.b16 %v750
    %v790 = vunpack.c.l.b16 %v751
    %v791 = vunpack.c.l.b16 %v752
    %v792 = vunpack.c.l.b16 %v753
    %v793 = vunpack.c.l.b16 %v754
    %v794 = vunpack.c.l.b16 %v755
    %v795 = vpack.c.b16 %v780, %v779
    %v796 = vpack.c.b16 %v782, %v781
    %v797 = vpack.c.b16 %v784, %v783
    %v798 = vpack.c.b16 %v786, %v785
    %v799 = vpack.c.b16 %v788, %v787
    %v800 = vpack.c.b16 %v790, %v789
    %v801 = vpack.c.b16 %v792, %v791
    %v802 = vpack.c.b16 %v794, %v793
    %811 = vmatprep.subr.bf16.mxu0 0
    %812 = vmatpush1.bf16.msra.mxu0 %v802
    %813 = vmatprep.subr.bf16.mxu0 0
    %814 = vmatpush1.bf16.msra.mxu0 %v801
    %815 = vmatprep.subr.bf16.mxu0 0
    %816 = vmatpush1.bf16.msra.mxu0 %v800
    %817 = vmatprep.subr.bf16.mxu0 0
    %818 = vmatpush1.bf16.msra.mxu0 %v799
    %819 = vmatprep.subr.bf16.mxu0 0
    %820 = vmatpush1.bf16.msra.mxu0 %v798
    %821 = vmatprep.subr.bf16.mxu0 0
    %822 = vmatpush1.bf16.msra.mxu0 %v797
    %823 = vmatprep.subr.bf16.mxu0 0
    %824 = vmatpush1.bf16.msra.mxu0 %v796
    %825 = vmatprep.subr.bf16.mxu0 0
    %826 = vmatpush1.bf16.msra.mxu0 %v795
    %827 = vmatprep.subr.bf16.mxu0 0
    %828 = vmatpush2.bf16.msra.mxu0 0
    %829 = vmatprep.subr.bf16.mxu0 0
    %830 = vmatpush2.bf16.msra.mxu0 0
    %831 = vmatprep.subr.bf16.mxu0 0
    %832 = vmatpush2.bf16.msra.mxu0 0
    %833 = vmatprep.subr.bf16.mxu0 0
    %834 = vmatpush2.bf16.msra.mxu0 0
    %835 = vmatprep.subr.bf16.mxu0 0
    %836 = vmatpush2.bf16.msra.mxu0 0
    %837 = vmatprep.subr.bf16.mxu0 0
    %838 = vmatpush2.bf16.msra.mxu0 0
    %839 = vmatprep.subr.bf16.mxu0 0
    %840 = vmatpush2.bf16.msra.mxu0 0
    %841 = vmatprep.subr.bf16.mxu0 0
    %842 = vmatpush2.bf16.msra.mxu0 0
    %843 = vmatprep.mubr.bf16.mxu0 0
    %844 = vmatmul.mubr.bf16.gmra.mxu0 %v739
    %v845 = vpop.f32.mrf.mxu0
    %v846 = vadd.f32 %v761, %v845
    %v847 = vpop.f32.mrf.mxu0
    %v848 = vpop.f32.mrf.mxu0
    %v849 = vpop.f32.mrf.mxu0
    %850 = vdwg.mxu0
    %vm851 = vcmask 254976
    %852 = vst.msk [vmem:[#allocation12] sm:$0x3] %vm851, %v846
    // Predicated region
    $region54: #{lstm_model_forward.1} parent=1 // pred_check
      _
    $region55: #{lstm_model_forward.1} parent=1 // pred_check_branch
      %854 = sbr.rel (0) target = $region57
    $region56: #{lstm_model_forward.1} parent=1 // pred_region
      %s856 = ssub.s32 32, 32
      %857 = vsyncadd [#allocation4], %s856
      %s859 = sshll.u32 [#allocation12], 4
      %s860 = int_to_ptr.vmem [resolvable:$true] %s859
      %862 = dma.vmem_to_hbm [thread:$0]  %s860, 32, %s8, [#allocation4]
    $region57: #{lstm_model_forward.1} parent=1 // pred_fallthru
      _
    // Predicated region
    $region58: #{lstm_model_forward.1} parent=1 // pred_check
      _
    $region59: #{lstm_model_forward.1} parent=1 // pred_check_branch
      %864 = sbr.rel (0) target = $region61
    $region60: #{lstm_model_forward.1} parent=1 // pred_region
      %865 = dma.done [#allocation4], 32
    $region61: #{lstm_model_forward.1} parent=1 // pred_fallthru
      _
    %866 = vsyncpa [#allocation3], 1
    %867 = vsyncpa [#allocation8], 1
    %868 = vsyncpa [#allocation11], 1
    %869 = vsyncpa [#allocation4], 1
    %870 = vsyncpa [#allocation5], 1

</llo_original>
